<compile_context>
chip_gen: v6e
topology: v6e:2x2x1
jax: 0.10.0
libtpu: 0.0.40
codegen_flags: <defaults>
</compile_context>

<pallas_src>
import math

import jax
import jax.numpy as jnp
from jax import lax
from jax.experimental import pallas as pl
from jax.experimental.pallas import tpu as pltpu


# Contract the LAST dim of both operands: A @ B^T  (same form splash-attention uses).
_NT = (((1,), (1,)), ((), ()))


def _round_up(x, m):
    return ((x + m - 1) // m) * m


def dnn_kernel(emb_ref, bias_ref, w1_ref, b1_ref, w2_ref, b2_ref, w3_ref, b3_ref,
               out_ref):
    """Fused MLP + slot-bias mean.

    Inputs arrive as natural [tb, feature] tiles; the NT contractions put the batch on
    the lane axis, so activations are full-width vregs and the (1, tb) output block is
    a lane-dense store.
    """
    s = bias_ref.shape[1]

    # Layer 1: W1 . emb^T : [16, D] x [tb, D] -> [16, tb]   (f32 MXU accumulate)
    h1 = lax.dot_general(w1_ref[...], emb_ref[...], _NT,
                         preferred_element_type=jnp.float32) + b1_ref[...]
    h1 = jnp.maximum(h1, 0.0)

    # Layer 2: [8, 16] @ [16, tb] -> [8, tb]
    h2 = jnp.dot(w2_ref[...], h1, preferred_element_type=jnp.float32) + b2_ref[...]
    h2 = jnp.maximum(h2, 0.0)

    # Layer 3 (out_features=1, K=8): VPU multiply + sublane reduce instead of an
    # N=1 MXU matmul.
    nn_out = jnp.sum(h2 * w3_ref[...], axis=0, keepdims=True)           # [1, tb]

    # Slot-bias mean as (1/S)*ones . bias^T so the result stays batch-on-lanes
    # (avoids a [tb,1] -> [1,tb] relayout); MXU is otherwise idle here.
    mean_w = jnp.full((1, s), 1.0 / s, dtype=jnp.float32)
    bias_mean = lax.dot_general(mean_w, bias_ref[...], _NT,
                                preferred_element_type=jnp.float32)     # [1, tb]

    # b3 is a scalar in SMEM; broadcast-add in f32.
    out_ref[...] = bias_mean + nn_out + b3_ref[0]                       # lane-dense


def dnn_forward(embeddings, slot_bias, params, *, block_b=8192):
    """embeddings: [B, D] f32; slot_bias: [B, S] f32; params in PyTorch [out, in] layout.

    Returns prediction of shape [B].  block_b=8192 keeps the double-buffered VMEM
    footprint (~17 MiB incl. lane padding of the narrow feature dims) under the 32 MiB
    scoped-VMEM limit on all of v5e/v6e/v7x.
    """
    B, D = embeddings.shape
    S = slot_bias.shape[1]
    block_b = max(128, _round_up(block_b, 128))

    if B < 1024:
        # Small batch: a single tile exactly covering a sublane-aligned batch
        # (the pad copy here is at most a few hundred KB).
        tb = _round_up(max(B, 8), 8)
        if tb != B:
            embeddings = jnp.pad(embeddings, ((0, tb - B), (0, 0)))
            slot_bias = jnp.pad(slot_bias, ((0, tb - B), (0, 0)))
        b_total = tb
    else:
        # Large batch: lane-aligned tiles, no host-side padding; Pallas masks the
        # ragged last tile (garbage batch lanes only ever produce garbage lanes that
        # are dropped by the masked output store / the [:B] slice).
        tb = min(block_b, _round_up(B, 128))
        if _round_up(B, 128) <= block_b:
            # Batch fits one tile: split in two so both v7x TensorCores get work.
            tb = _round_up(pl.cdiv(B, 2), 128)
        b_total = B

    grid = (pl.cdiv(b_total, tb),)

    w1 = params["w1"]                                     # [16, D] f32
    b1 = params["b1"]                                     # [16, 1] f32
    w2 = params["w2"]                                     # [8, 16] f32
    b2 = params["b2"]                                     # [8, 1]  f32
    w3 = params["w3"].T                                   # [8, 1]  f32 (VPU head)
    b3 = params["b3"].reshape((1,)).astype(jnp.float32)   # scalar -> SMEM

    const = lambda i: (0, 0)       # tiny weights: DMA'd once, VMEM-resident

    out = pl.pallas_call(
        dnn_kernel,
        out_shape=jax.ShapeDtypeStruct((1, b_total), jnp.float32),
        grid=grid,
        in_specs=[
            pl.BlockSpec((tb, D), lambda i: (i, 0)),      # embeddings tile (natural layout)
            pl.BlockSpec((tb, S), lambda i: (i, 0)),      # slot-bias tile (natural layout)
            pl.BlockSpec(w1.shape, const),
            pl.BlockSpec(b1.shape, const),
            pl.BlockSpec(w2.shape, const),
            pl.BlockSpec(b2.shape, const),
            pl.BlockSpec(w3.shape, const),
            pl.BlockSpec(memory_space=pltpu.MemorySpace.SMEM),   # b3 scalar
        ],
        out_specs=pl.BlockSpec((1, tb), lambda i: (0, i)),
        compiler_params=pltpu.CompilerParams(
            dimension_semantics=("parallel",),            # megacore-shard the batch axis
            vmem_limit_bytes=32 * 1024 * 1024,
        ),
    )(embeddings, slot_bias, w1, b1, w2, b2, w3, b3)

    # prediction.squeeze(): drop any padded lanes, return [B].
    return out.reshape(-1)[:B]


def init_params(key, input_dims, hidden_dims):
    """Kaiming-uniform weights (bound = sqrt(6/fan_in)), zero biases.

    Weights stored in PyTorch's [out, in] layout; the kernel contracts the shared
    feature axis directly (NT matmuls), so no transposes are needed anywhere.
    """
    dims = [input_dims] + hidden_dims + [1]
    params = {}
    for i in range(len(dims) - 1):
        fan_in, fan_out = dims[i], dims[i + 1]
        key, sub = jax.random.split(key)
        bound = math.sqrt(6.0 / fan_in)
        params[f"w{i + 1}"] = jax.random.uniform(
            sub, (fan_out, fan_in), jnp.float32, -bound, bound)
        params[f"b{i + 1}"] = jnp.zeros((fan_out, 1), jnp.float32)
    return params


if __name__ == "__main__":
    key = jax.random.PRNGKey(0)

    # Shapes implied by the module: fid_dims=4, slot_num=8 -> input_dims=32,
    # hidden_dims=[16, 8]; small batch for the smoke test.
    batch = 8
    fid_dims = 4
    slot_num = 8
    input_dims = fid_dims * slot_num
    hidden_dims = [16, 8]

    k_emb, k_bias, k_param = jax.random.split(key, 3)
    # embeddings = stack of concatenated per-fid embeddings -> [B, fid_dims * slot_num]
    embeddings = jax.random.normal(k_emb, (batch, input_dims), jnp.float32)
    # bias_list = concatenated per-fid scalar biases         -> [B, slot_num]
    slot_bias = jax.random.normal(k_bias, (batch, slot_num), jnp.float32)
    # TODO(synk): fidembeding.get_embedding (hash-table embedding lookup) has no clean
    # Pallas equivalent; embeddings/biases are synthesized directly as dense inputs.

    params = init_params(k_param, input_dims, hidden_dims)

    pred = dnn_forward(embeddings, slot_bias, params)
    jax.block_until_ready(pred)

    # Pure-JAX f32 reference (kernel is f32 end to end).
    h1 = jnp.maximum(embeddings @ params["w1"].T + params["b1"].T, 0.0)
    h2 = jnp.maximum(h1 @ params["w2"].T + params["b2"].T, 0.0)
    nn_out = (h2 @ params["w3"].T + params["b3"].T).reshape(-1)
    ref = jnp.mean(slot_bias, axis=1) + nn_out

    assert pred.shape == (batch,)
    assert jnp.allclose(pred, ref, atol=1e-3, rtol=1e-3), (pred, ref)

    print("KERNEL_OK")
</pallas_src>

<mosaic_0001>
module attributes {stable_mosaic.version = 11 : i64} {
  func.func @dnn_kernel(%arg0: i32, %arg1: memref<8x32xf32, #tpu.memory_space<vmem>>, %arg2: memref<8x8xf32, #tpu.memory_space<vmem>>, %arg3: memref<16x32xf32, #tpu.memory_space<vmem>>, %arg4: memref<16x1xf32, #tpu.memory_space<vmem>>, %arg5: memref<8x16xf32, #tpu.memory_space<vmem>>, %arg6: memref<8x1xf32, #tpu.memory_space<vmem>>, %arg7: memref<8x1xf32, #tpu.memory_space<vmem>>, %arg8: memref<1xf32, #tpu.memory_space<smem>>, %arg9: memref<1x8xf32, #tpu.memory_space<vmem>>) attributes {dimension_semantics = [#tpu.dimension_semantics<parallel>], iteration_bounds = array<i64: 1>, scalar_prefetch = 0 : i64, scratch_operands = 0 : i64, tpu.core_type = #tpu.core_type<tc>, window_params = [{transform_indices = @transform_0, window_bounds = array<i64: 8, 32>}, {transform_indices = @transform_1, window_bounds = array<i64: 8, 8>}, {pipeline_mode = #tpu.pipeline_mode<synchronous>, transform_indices = @transform_2, window_bounds = array<i64: 16, 32>}, {pipeline_mode = #tpu.pipeline_mode<synchronous>, transform_indices = @transform_3, window_bounds = array<i64: 16, 1>}, {pipeline_mode = #tpu.pipeline_mode<synchronous>, transform_indices = @transform_4, window_bounds = array<i64: 8, 16>}, {pipeline_mode = #tpu.pipeline_mode<synchronous>, transform_indices = @transform_5, window_bounds = array<i64: 8, 1>}, {pipeline_mode = #tpu.pipeline_mode<synchronous>, transform_indices = @transform_6, window_bounds = array<i64: 8, 1>}, {transform_indices = @transform_7, window_bounds = array<i64: 1>}, {transform_indices = @transform_8, window_bounds = array<i64: 1, 8>}]} {
    %c0 = arith.constant 0 : index
    %c0_0 = arith.constant 0 : index
    %0 = vector.load %arg3[%c0, %c0_0] : memref<16x32xf32, #tpu.memory_space<vmem>>, vector<16x32xf32>
    %c0_1 = arith.constant 0 : index
    %c0_2 = arith.constant 0 : index
    %1 = vector.load %arg1[%c0_1, %c0_2] : memref<8x32xf32, #tpu.memory_space<vmem>>, vector<8x32xf32>
    %cst = arith.constant dense<0.000000e+00> : vector<16x8xf32>
    %2 = tpu.matmul %0, %1, %cst {dimension_numbers = #tpu.dot_dimension_numbers<[1], [1], [0], [0], [0, 0, 1, 0], [], []>} : vector<16x32xf32>, vector<8x32xf32>, vector<16x8xf32> -> vector<16x8xf32>
    %c0_3 = arith.constant 0 : index
    %c0_4 = arith.constant 0 : index
    %3 = vector.load %arg4[%c0_3, %c0_4] : memref<16x1xf32, #tpu.memory_space<vmem>>, vector<16x1xf32>
    %4 = vector.broadcast %3 : vector<16x1xf32> to vector<16x8xf32>
    %5 = arith.addf %2, %4 : vector<16x8xf32>
    %cst_5 = arith.constant 0.000000e+00 : f32
    %6 = vector.broadcast %cst_5 : f32 to vector<16x8xf32>
    %7 = arith.maximumf %5, %6 : vector<16x8xf32>
    %c0_6 = arith.constant 0 : index
    %c0_7 = arith.constant 0 : index
    %8 = vector.load %arg5[%c0_6, %c0_7] : memref<8x16xf32, #tpu.memory_space<vmem>>, vector<8x16xf32>
    %cst_8 = arith.constant dense<0.000000e+00> : vector<8x8xf32>
    %9 = tpu.matmul %8, %7, %cst_8 {dimension_numbers = #tpu.dot_dimension_numbers<[1], [0], [0], [1], [0, 0, 1, 1], [], []>} : vector<8x16xf32>, vector<16x8xf32>, vector<8x8xf32> -> vector<8x8xf32>
    %c0_9 = arith.constant 0 : index
    %c0_10 = arith.constant 0 : index
    %10 = vector.load %arg6[%c0_9, %c0_10] : memref<8x1xf32, #tpu.memory_space<vmem>>, vector<8x1xf32>
    %11 = vector.broadcast %10 : vector<8x1xf32> to vector<8x8xf32>
    %12 = arith.addf %9, %11 : vector<8x8xf32>
    %cst_11 = arith.constant 0.000000e+00 : f32
    %13 = vector.broadcast %cst_11 : f32 to vector<8x8xf32>
    %14 = arith.maximumf %12, %13 : vector<8x8xf32>
    %c0_12 = arith.constant 0 : index
    %c0_13 = arith.constant 0 : index
    %15 = vector.load %arg7[%c0_12, %c0_13] : memref<8x1xf32, #tpu.memory_space<vmem>>, vector<8x1xf32>
    %16 = vector.broadcast %15 : vector<8x1xf32> to vector<8x8xf32>
    %17 = arith.mulf %14, %16 : vector<8x8xf32>
    %cst_14 = arith.constant dense<0.000000e+00> : vector<8xf32>
    %18 = vector.multi_reduction <add>, %17, %cst_14 [0] : vector<8x8xf32> to vector<8xf32>
    %19 = vector.shape_cast %18 : vector<8xf32> to vector<1x8xf32>
    %cst_15 = arith.constant 1.250000e-01 : f32
    %20 = vector.broadcast %cst_15 : f32 to vector<1x8xf32>
    %c0_16 = arith.constant 0 : index
    %c0_17 = arith.constant 0 : index
    %21 = vector.load %arg2[%c0_16, %c0_17] : memref<8x8xf32, #tpu.memory_space<vmem>>, vector<8x8xf32>
    %cst_18 = arith.constant dense<0.000000e+00> : vector<1x8xf32>
    %22 = tpu.matmul %20, %21, %cst_18 {dimension_numbers = #tpu.dot_dimension_numbers<[1], [1], [0], [0], [0, 0, 1, 0], [], []>} : vector<1x8xf32>, vector<8x8xf32>, vector<1x8xf32> -> vector<1x8xf32>
    %23 = arith.addf %22, %19 : vector<1x8xf32>
    %c0_19 = arith.constant 0 : index
    %24 = memref.load %arg8[%c0_19] : memref<1xf32, #tpu.memory_space<smem>>
    %25 = vector.broadcast %24 : f32 to vector<1x8xf32>
    %26 = arith.addf %23, %25 : vector<1x8xf32>
    %c0_20 = arith.constant 0 : index
    %c0_21 = arith.constant 0 : index
    %27 = vector.load %arg9[%c0_20, %c0_21] : memref<1x8xf32, #tpu.memory_space<vmem>>, vector<1x8xf32>
    tpu.vector_store %arg9[%c0_20, %c0_21], %26 {strides = array<i32>} : memref<1x8xf32, #tpu.memory_space<vmem>>, vector<1x8xf32>,
    return
  }
  func.func @transform_0(%arg0: i32) -> (i32, i32) {
    %c0_i32 = arith.constant 0 : i32
    %c0_i32_0 = arith.constant 0 : i32
    return %arg0, %c0_i32 : i32, i32
  }
  func.func @transform_1(%arg0: i32) -> (i32, i32) {
    %c0_i32 = arith.constant 0 : i32
    %c0_i32_0 = arith.constant 0 : i32
    return %arg0, %c0_i32 : i32, i32
  }
  func.func @transform_2(%arg0: i32) -> (i32, i32) {
    %c0_i32 = arith.constant 0 : i32
    %c0_i32_0 = arith.constant 0 : i32
    %c0_i32_1 = arith.constant 0 : i32
    return %c0_i32, %c0_i32_0 : i32, i32
  }
  func.func @transform_3(%arg0: i32) -> (i32, i32) {
    %c0_i32 = arith.constant 0 : i32
    %c0_i32_0 = arith.constant 0 : i32
    %c0_i32_1 = arith.constant 0 : i32
    return %c0_i32, %c0_i32_0 : i32, i32
  }
  func.func @transform_4(%arg0: i32) -> (i32, i32) {
    %c0_i32 = arith.constant 0 : i32
    %c0_i32_0 = arith.constant 0 : i32
    %c0_i32_1 = arith.constant 0 : i32
    return %c0_i32, %c0_i32_0 : i32, i32
  }
  func.func @transform_5(%arg0: i32) -> (i32, i32) {
    %c0_i32 = arith.constant 0 : i32
    %c0_i32_0 = arith.constant 0 : i32
    %c0_i32_1 = arith.constant 0 : i32
    return %c0_i32, %c0_i32_0 : i32, i32
  }
  func.func @transform_6(%arg0: i32) -> (i32, i32) {
    %c0_i32 = arith.constant 0 : i32
    %c0_i32_0 = arith.constant 0 : i32
    %c0_i32_1 = arith.constant 0 : i32
    return %c0_i32, %c0_i32_0 : i32, i32
  }
  func.func @transform_7(%arg0: i32) -> i32 {
    %c0_i32 = arith.constant 0 : i32
    %c0_i32_0 = arith.constant 0 : i32
    return %c0_i32 : i32
  }
  func.func @transform_8(%arg0: i32) -> (i32, i32) {
    %c0_i32 = arith.constant 0 : i32
    %c0_i32_0 = arith.constant 0 : i32
    return %c0_i32, %arg0 : i32, i32
  }
}

</mosaic_0001>

<llo_original>
// kernel: tpu_custom_call.1
$region0: #{tpu_custom_call.1}
  #allocation0 [shape = 'u32[]', space=smem, size = 0x4, offset = 0x4, fixed_abs, tag = 'smem constant byte address 0x4 - core index']
  #allocation1 [shape = 'u32[144,128]{1,0:T(1,128)}', space=vmem, size = 0x12000, scoped, tag = 'internal scratch']
  #allocation2 [shape = 'f32[1]{0:T(128)S(6)}', space=smem, size = 0x200, scoped, tag = 'scoped memory for tpu_custom_call.1']
  %s0 = inlined_call_operand.vmem [shape: f32[8,32], index: 0, kind: input, shape index: {}]
  %s1 = inlined_call_operand.vmem [shape: f32[8,8], index: 1, kind: input, shape index: {}]
  %s2 = inlined_call_operand.vmem [shape: f32[16,32], index: 2, kind: input, shape index: {}]
  %s3 = inlined_call_operand.vmem [shape: f32[16,1], index: 3, kind: input, shape index: {}]
  %s4 = inlined_call_operand.vmem [shape: f32[8,16], index: 4, kind: input, shape index: {}]
  %s5 = inlined_call_operand.vmem [shape: f32[8,1], index: 5, kind: input, shape index: {}]
  %s6 = inlined_call_operand.vmem [shape: f32[8,1], index: 6, kind: input, shape index: {}]
  %s7 = inlined_call_operand.<no memory space> [shape: f32[1], index: 7, kind: input, shape index: {}]
  %s8 = inlined_call_operand.hbm [shape: f32[1,8], index: 8, kind: output, shape index: {}]
  %s9 = sld [smem:[#allocation0]]
  $region42: #{tpu_custom_call.1} parent=0
    _
  %s11 = ssub.s32 1, %s9
  %s12 = scalar_select 0, %s11, %s9
  %13 = sst [smem:[#allocation2]] %s7
  $region1: #{tpu_custom_call.1} parent=0
    #allocation3 [shape = 'u8[512]{0}', space=vmem, size = 0x400, scoped, tag = 'output window, operand 0, single buffered']
    #allocation4 [shape = 's32[1]{0}', space=sflag, size = 0x4, scoped, tag = 'scoped memory for tpu_custom_call.1']
    %14 = vsyncpa [#allocation4], 0
    // Predicated region
    $region2: #{tpu_custom_call.1} parent=1 // pred_check
      _
    $region3: #{tpu_custom_call.1} parent=1 // pred_check_branch
      %16 = sbr.rel (0) target = $region5
    $region4: #{tpu_custom_call.1} parent=1 // pred_region
      _
    $region5: #{tpu_custom_call.1} parent=1 // pred_fallthru
      _
    // Predicated region
    $region6: #{tpu_custom_call.1} parent=1 // pred_check
      _
    $region7: #{tpu_custom_call.1} parent=1 // pred_check_branch
      %18 = sbr.rel (0) target = $region9
    $region8: #{tpu_custom_call.1} parent=1 // pred_region
      _
    $region9: #{tpu_custom_call.1} parent=1 // pred_fallthru
      _
    // Predicated region
    $region10: #{tpu_custom_call.1} parent=1 // pred_check
      _
    $region11: #{tpu_custom_call.1} parent=1 // pred_check_branch
      %20 = sbr.rel (0) target = $region13
    $region12: #{tpu_custom_call.1} parent=1 // pred_region
      _
    $region13: #{tpu_custom_call.1} parent=1 // pred_fallthru
      _
    // Predicated region
    $region14: #{tpu_custom_call.1} parent=1 // pred_check
      _
    $region15: #{tpu_custom_call.1} parent=1 // pred_check_branch
      %22 = sbr.rel (0) target = $region17
    $region16: #{tpu_custom_call.1} parent=1 // pred_region
      _
    $region17: #{tpu_custom_call.1} parent=1 // pred_fallthru
      _
    // Predicated region
    $region18: #{tpu_custom_call.1} parent=1 // pred_check
      _
    $region19: #{tpu_custom_call.1} parent=1 // pred_check_branch
      %24 = sbr.rel (0) target = $region21
    $region20: #{tpu_custom_call.1} parent=1 // pred_region
      _
    $region21: #{tpu_custom_call.1} parent=1 // pred_fallthru
      _
    // Predicated region
    $region22: #{tpu_custom_call.1} parent=1 // pred_check
      _
    $region23: #{tpu_custom_call.1} parent=1 // pred_check_branch
      %26 = sbr.rel (0) target = $region25
    $region24: #{tpu_custom_call.1} parent=1 // pred_region
      _
    $region25: #{tpu_custom_call.1} parent=1 // pred_fallthru
      _
    // Predicated region
    $region26: #{tpu_custom_call.1} parent=1 // pred_check
      _
    $region27: #{tpu_custom_call.1} parent=1 // pred_check_branch
      %28 = sbr.rel (0) target = $region29
    $region28: #{tpu_custom_call.1} parent=1 // pred_region
      _
    $region29: #{tpu_custom_call.1} parent=1 // pred_fallthru
      _
    // Predicated region
    $region30: #{tpu_custom_call.1} parent=1 // pred_check
      _
    $region31: #{tpu_custom_call.1} parent=1 // pred_check_branch
      %30 = sbr.rel (0) target = $region33
    $region32: #{tpu_custom_call.1} parent=1 // pred_region
      _
    $region33: #{tpu_custom_call.1} parent=1 // pred_fallthru
      _
    %v31 = vld [vmem:[%s2] sm:$0xff]
    %v32 = vld [vmem:[%s2 + $0x8] sm:$0xff]
    %v33 = vld [vmem:[%s0] sm:$0xff]
    %v34 = vld [vmem:[%s3] sm:$0xff]
    %v35 = vld [vmem:[%s3 + $0x8] sm:$0xff]
    %37 = vset.pattern.permute.xlu0 0
    %38 = vperm.xlu0 %37, %v34
    %v39 = vpop.permute.xlu0 %38
    %42 = vset.pattern.permute.xlu0 0
    %43 = vperm.xlu0 %42, %v35
    %v44 = vpop.permute.xlu0 %43
    %vm46 = vcmask 261120
    %v48 = vsel %vm46, %v31, 0
    %v51 = vsel %vm46, %v32, 0
    %v54 = vsel %vm46, %v33, 0
    %56 = vmatprep.subr.mxu0 0.0
    %57 = vmatpush1.xpose.msra.mxu0 0.0
    %58 = vmatprep.subr.mxu0 0.0
    %59 = vmatpush1.xpose.msra.mxu0 0.0
    %60 = vmatprep.subr.mxu0 0.0
    %61 = vmatpush1.xpose.msra.mxu0 0.0
    %62 = vmatprep.subr.mxu0 0.0
    %63 = vmatpush1.xpose.msra.mxu0 0.0
    %64 = vmatprep.subr.mxu0 0.0
    %65 = vmatpush1.xpose.msra.mxu0 0.0
    %66 = vmatprep.subr.mxu0 0.0
    %67 = vmatpush1.xpose.msra.mxu0 0.0
    %68 = vmatprep.subr.mxu0 0.0
    %69 = vmatpush1.xpose.msra.mxu0 0.0
    %70 = vmatprep.subr.mxu0 0.0
    %71 = vmatpush1.xpose.msra.mxu0 0.0
    %72 = vmatprep.subr.mxu0 0.0
    %73 = vmatpush1.xpose.msra.mxu0 0.0
    %74 = vmatprep.subr.mxu0 0.0
    %75 = vmatpush1.xpose.msra.mxu0 0.0
    %76 = vmatprep.subr.mxu0 0.0
    %77 = vmatpush1.xpose.msra.mxu0 0.0
    %78 = vmatprep.subr.mxu0 0.0
    %79 = vmatpush1.xpose.msra.mxu0 0.0
    %80 = vmatprep.subr.mxu0 0.0
    %81 = vmatpush1.xpose.msra.mxu0 0.0
    %82 = vmatprep.subr.mxu0 0.0
    %83 = vmatpush1.xpose.msra.mxu0 0.0
    %84 = vmatprep.subr.mxu0 0.0
    %85 = vmatpush1.xpose.msra.mxu0 0.0
    %86 = vmatprep.subr.mxu0 0.0
    %87 = vmatpush1.xpose.msra.mxu0 %v54
    %88 = vmatprep.subr.mxu0 0.0
    %89 = vmatpush2.xpose.msra.mxu0 0.0
    %90 = vmatprep.subr.mxu0 0.0
    %91 = vmatpush2.xpose.msra.mxu0 0.0
    %92 = vmatprep.subr.mxu0 0.0
    %93 = vmatpush2.xpose.msra.mxu0 0.0
    %94 = vmatprep.subr.mxu0 0.0
    %95 = vmatpush2.xpose.msra.mxu0 0.0
    %96 = vmatprep.subr.mxu0 0.0
    %97 = vmatpush2.xpose.msra.mxu0 0.0
    %98 = vmatprep.subr.mxu0 0.0
    %99 = vmatpush2.xpose.msra.mxu0 0.0
    %100 = vmatprep.subr.mxu0 0.0
    %101 = vmatpush2.xpose.msra.mxu0 0.0
    %102 = vmatprep.subr.mxu0 0.0
    %103 = vmatpush2.xpose.msra.mxu0 0.0
    %104 = vmatprep.subr.mxu0 0.0
    %105 = vmatpush2.xpose.msra.mxu0 0.0
    %106 = vmatprep.subr.mxu0 0.0
    %107 = vmatpush2.xpose.msra.mxu0 0.0
    %108 = vmatprep.subr.mxu0 0.0
    %109 = vmatpush2.xpose.msra.mxu0 0.0
    %110 = vmatprep.subr.mxu0 0.0
    %111 = vmatpush2.xpose.msra.mxu0 0.0
    %112 = vmatprep.subr.mxu0 0.0
    %113 = vmatpush2.xpose.msra.mxu0 0.0
    %114 = vmatprep.subr.mxu0 0.0
    %115 = vmatpush2.xpose.msra.mxu0 0.0
    %116 = vmatprep.subr.mxu0 0.0
    %117 = vmatpush2.xpose.msra.mxu0 0.0
    %118 = vmatprep.subr.mxu0 0.0
    %119 = vmatpush2.xpose.msra.mxu0 0.0
    %120 = vmatprep.mubr.f32.mxu0 0.0
    %121 = vmatmul.mubr.f32.gmra.mxu0 %v48
    %v122 = vpop.f32.mrf.mxu0
    %v123 = vadd.f32 %v39, %v122
    %v124 = vpop.f32.mrf.mxu0
    %125 = vmatprep.mubr.f32.mxu0 0.0
    %126 = vmatmul.mubr.f32.gmra.mxu0 %v51
    %v127 = vpop.f32.mrf.mxu0
    %v128 = vadd.f32 %v44, %v127
    %v129 = vpop.f32.mrf.mxu0
    %130 = vdwg.mxu0
    %v131 = vmax.f32 %v123, 0.0
    %v132 = vmax.f32 %v128, 0.0
    %v133 = vld [vmem:[%s4] sm:$0xff]
    %v134 = vld [vmem:[%s5] sm:$0xff]
    %136 = vset.pattern.permute.xlu0 0
    %137 = vperm.xlu0 %136, %v134
    %v138 = vpop.permute.xlu0 %137
    %vm140 = vcmask 130048
    %v142 = vsel %vm140, %v133, 0
    %144 = vmatprep.subr.mxu0 0.0
    %145 = vmatpush1.msra.mxu0 0.0
    %146 = vmatprep.subr.mxu0 0.0
    %147 = vmatpush1.msra.mxu0 0.0
    %148 = vmatprep.subr.mxu0 0.0
    %149 = vmatpush1.msra.mxu0 0.0
    %150 = vmatprep.subr.mxu0 0.0
    %151 = vmatpush1.msra.mxu0 0.0
    %152 = vmatprep.subr.mxu0 0.0
    %153 = vmatpush1.msra.mxu0 0.0
    %154 = vmatprep.subr.mxu0 0.0
    %155 = vmatpush1.msra.mxu0 0.0
    %156 = vmatprep.subr.mxu0 0.0
    %157 = vmatpush1.msra.mxu0 0.0
    %158 = vmatprep.subr.mxu0 0.0
    %159 = vmatpush1.msra.mxu0 0.0
    %160 = vmatprep.subr.mxu0 0.0
    %161 = vmatpush1.msra.mxu0 0.0
    %162 = vmatprep.subr.mxu0 0.0
    %163 = vmatpush1.msra.mxu0 0.0
    %164 = vmatprep.subr.mxu0 0.0
    %165 = vmatpush1.msra.mxu0 0.0
    %166 = vmatprep.subr.mxu0 0.0
    %167 = vmatpush1.msra.mxu0 0.0
    %168 = vmatprep.subr.mxu0 0.0
    %169 = vmatpush1.msra.mxu0 0.0
    %170 = vmatprep.subr.mxu0 0.0
    %171 = vmatpush1.msra.mxu0 0.0
    %172 = vmatprep.subr.mxu0 0.0
    %173 = vmatpush1.msra.mxu0 %v132
    %174 = vmatprep.subr.mxu0 0.0
    %175 = vmatpush1.msra.mxu0 %v131
    %176 = vmatprep.subr.mxu0 0.0
    %177 = vmatpush2.msra.mxu0 0.0
    %178 = vmatprep.subr.mxu0 0.0
    %179 = vmatpush2.msra.mxu0 0.0
    %180 = vmatprep.subr.mxu0 0.0
    %181 = vmatpush2.msra.mxu0 0.0
    %182 = vmatprep.subr.mxu0 0.0
    %183 = vmatpush2.msra.mxu0 0.0
    %184 = vmatprep.subr.mxu0 0.0
    %185 = vmatpush2.msra.mxu0 0.0
    %186 = vmatprep.subr.mxu0 0.0
    %187 = vmatpush2.msra.mxu0 0.0
    %188 = vmatprep.subr.mxu0 0.0
    %189 = vmatpush2.msra.mxu0 0.0
    %190 = vmatprep.subr.mxu0 0.0
    %191 = vmatpush2.msra.mxu0 0.0
    %192 = vmatprep.subr.mxu0 0.0
    %193 = vmatpush2.msra.mxu0 0.0
    %194 = vmatprep.subr.mxu0 0.0
    %195 = vmatpush2.msra.mxu0 0.0
    %196 = vmatprep.subr.mxu0 0.0
    %197 = vmatpush2.msra.mxu0 0.0
    %198 = vmatprep.subr.mxu0 0.0
    %199 = vmatpush2.msra.mxu0 0.0
    %200 = vmatprep.subr.mxu0 0.0
    %201 = vmatpush2.msra.mxu0 0.0
    %202 = vmatprep.subr.mxu0 0.0
    %203 = vmatpush2.msra.mxu0 0.0
    %204 = vmatprep.subr.mxu0 0.0
    %205 = vmatpush2.msra.mxu0 0.0
    %206 = vmatprep.subr.mxu0 0.0
    %207 = vmatpush2.msra.mxu0 0.0
    %208 = vmatprep.mubr.f32.mxu0 0.0
    %209 = vmatmul.mubr.f32.gmra.mxu0 %v142
    %v210 = vpop.f32.mrf.mxu0
    %v211 = vadd.f32 %v138, %v210
    %v212 = vpop.f32.mrf.mxu0
    %213 = vdwg.mxu0
    %v214 = vmax.f32 %v211, 0.0
    %v215 = vld [vmem:[%s6] sm:$0xff]
    %217 = vset.pattern.permute.xlu0 0
    %218 = vperm.xlu0 %217, %v215
    %v219 = vpop.permute.xlu0 %218
    %v221 = vmul.f32 %v214, %v219
    %vm222 = vcmask 64512
    %v223 = vsel %vm222, %v221, 0.0
    %v224 = vrot.slane %v223, 4
    %v225 = vadd.f32 %v223, %v224
    %v226 = vrot.slane %v225, 2
    %v227 = vadd.f32 %v225, %v226
    %v228 = vrot.slane %v227, 1
    %v229 = vadd.f32 %v227, %v228
    %v230 = vld [vmem:[%s1] sm:$0xff]
    %v232 = vsel %vm222, 0.125, 0
    %v235 = vsel %vm222, %v230, 0
    %237 = vmatprep.subr.mxu0 0.0
    %238 = vmatpush1.xpose.msra.mxu0 0.0
    %239 = vmatprep.subr.mxu0 0.0
    %240 = vmatpush1.xpose.msra.mxu0 0.0
    %241 = vmatprep.subr.mxu0 0.0
    %242 = vmatpush1.xpose.msra.mxu0 0.0
    %243 = vmatprep.subr.mxu0 0.0
    %244 = vmatpush1.xpose.msra.mxu0 0.0
    %245 = vmatprep.subr.mxu0 0.0
    %246 = vmatpush1.xpose.msra.mxu0 0.0
    %247 = vmatprep.subr.mxu0 0.0
    %248 = vmatpush1.xpose.msra.mxu0 0.0
    %249 = vmatprep.subr.mxu0 0.0
    %250 = vmatpush1.xpose.msra.mxu0 0.0
    %251 = vmatprep.subr.mxu0 0.0
    %252 = vmatpush1.xpose.msra.mxu0 0.0
    %253 = vmatprep.subr.mxu0 0.0
    %254 = vmatpush1.xpose.msra.mxu0 0.0
    %255 = vmatprep.subr.mxu0 0.0
    %256 = vmatpush1.xpose.msra.mxu0 0.0
    %257 = vmatprep.subr.mxu0 0.0
    %258 = vmatpush1.xpose.msra.mxu0 0.0
    %259 = vmatprep.subr.mxu0 0.0
    %260 = vmatpush1.xpose.msra.mxu0 0.0
    %261 = vmatprep.subr.mxu0 0.0
    %262 = vmatpush1.xpose.msra.mxu0 0.0
    %263 = vmatprep.subr.mxu0 0.0
    %264 = vmatpush1.xpose.msra.mxu0 0.0
    %265 = vmatprep.subr.mxu0 0.0
    %266 = vmatpush1.xpose.msra.mxu0 0.0
    %267 = vmatprep.subr.mxu0 0.0
    %268 = vmatpush1.xpose.msra.mxu0 %v235
    %269 = vmatprep.subr.mxu0 0.0
    %270 = vmatpush2.xpose.msra.mxu0 0.0
    %271 = vmatprep.subr.mxu0 0.0
    %272 = vmatpush2.xpose.msra.mxu0 0.0
    %273 = vmatprep.subr.mxu0 0.0
    %274 = vmatpush2.xpose.msra.mxu0 0.0
    %275 = vmatprep.subr.mxu0 0.0
    %276 = vmatpush2.xpose.msra.mxu0 0.0
    %277 = vmatprep.subr.mxu0 0.0
    %278 = vmatpush2.xpose.msra.mxu0 0.0
    %279 = vmatprep.subr.mxu0 0.0
    %280 = vmatpush2.xpose.msra.mxu0 0.0
    %281 = vmatprep.subr.mxu0 0.0
    %282 = vmatpush2.xpose.msra.mxu0 0.0
    %283 = vmatprep.subr.mxu0 0.0
    %284 = vmatpush2.xpose.msra.mxu0 0.0
    %285 = vmatprep.subr.mxu0 0.0
    %286 = vmatpush2.xpose.msra.mxu0 0.0
    %287 = vmatprep.subr.mxu0 0.0
    %288 = vmatpush2.xpose.msra.mxu0 0.0
    %289 = vmatprep.subr.mxu0 0.0
    %290 = vmatpush2.xpose.msra.mxu0 0.0
    %291 = vmatprep.subr.mxu0 0.0
    %292 = vmatpush2.xpose.msra.mxu0 0.0
    %293 = vmatprep.subr.mxu0 0.0
    %294 = vmatpush2.xpose.msra.mxu0 0.0
    %295 = vmatprep.subr.mxu0 0.0
    %296 = vmatpush2.xpose.msra.mxu0 0.0
    %297 = vmatprep.subr.mxu0 0.0
    %298 = vmatpush2.xpose.msra.mxu0 0.0
    %299 = vmatprep.subr.mxu0 0.0
    %300 = vmatpush2.xpose.msra.mxu0 0.0
    %301 = vmatprep.mubr.f32.mxu0 0.0
    %302 = vmatmul.mubr.f32.gmra.mxu0 %v232
    %v303 = vpop.f32.mrf.mxu0
    %v304 = vadd.f32 %v229, %v303
    %v305 = vpop.f32.mrf.mxu0
    %306 = vdwg.mxu0
    %s307 = sld [smem:[#allocation2]]
    %v308 = vstv %s307
    %v309 = vadd.f32 %v304, %v308
    %vm310 = vcmask 57344
    %311 = vst.msk [vmem:[#allocation3] sm:$0x1] %vm310, %v309
    // Predicated region
    $region34: #{tpu_custom_call.1} parent=1 // pred_check
      _
    $region35: #{tpu_custom_call.1} parent=1 // pred_check_branch
      %313 = sbr.rel (0) target = $region37
    $region36: #{tpu_custom_call.1} parent=1 // pred_region
      %s315 = ssub.s32 16, 16
      %316 = vsyncadd [#allocation4], %s315
      %s318 = sshll.u32 [#allocation3], 4
      %s319 = int_to_ptr.vmem [resolvable:$true] %s318
      %321 = dma.vmem_to_hbm [thread:$0]  %s319, 16, %s8, [#allocation4]
    $region37: #{tpu_custom_call.1} parent=1 // pred_fallthru
      _
    // Predicated region
    $region38: #{tpu_custom_call.1} parent=1 // pred_check
      _
    $region39: #{tpu_custom_call.1} parent=1 // pred_check_branch
      %323 = sbr.rel (0) target = $region41
    $region40: #{tpu_custom_call.1} parent=1 // pred_region
      %324 = dma.done [#allocation4], 16
    $region41: #{tpu_custom_call.1} parent=1 // pred_fallthru
      _
    %325 = vsyncpa [#allocation4], 1

</llo_original>
